<compile_context>
chip_gen: v6e
topology: v6e:2x2x1
jax: 0.10.0
libtpu: 0.0.40
codegen_flags: <defaults>
</compile_context>

<pallas_src>
import jax
import jax.numpy as jnp
from jax.experimental import pallas as pl
from jax.experimental.pallas import tpu as pltpu

FEAT_DIM = 2048        # backbone feature dim (resnet101 final channels)
EMB_DIM = 128          # embedding_size
NUM_CLASSES = 256      # num_classes (small synthetic, lane-friendly)
BN_EPS = 1e-5          # nn.BatchNorm1d(eps=1e-05)
NORM_EPS = 1e-12       # F.normalize default eps
MAX_TB = 1024          # max batch-row tile (8 MiB f32 tile, ~86% HBM roofline)


def _round_up(x, m):
    return ((x + m - 1) // m) * m


def _choose_batch_tile(batch, max_tile=MAX_TB):
    """Balanced batch tiles.

    * batch <= 16: a single full-extent tile (satisfies the (8,128) rule via
      "block dim == array dim").
    * batch  > 16: at least 2 tiles (so v7x's two TensorCores both get work
      under dimension_semantics=("parallel",)), each <= max_tile rows and
      rounded up to 16 sublanes (bf16 vreg packing).  No host padding: the
      ragged last tile is masked by Pallas.
    """
    if batch <= 16:
        return batch
    n_tiles = max(2, pl.cdiv(batch, max_tile))
    tile = _round_up(pl.cdiv(batch, n_tiles), 16)
    return min(tile, max_tile)


def _head_kernel(x_ref, w_emb_ref, b_ref, w_cls_ref, out_ref):
    # x_ref     : (TB, FEAT_DIM)          f32    batch tile (native dtype)
    # w_emb_ref : (FEAT_DIM, EMB_DIM)     bf16   BN-folded embedding weight
    # b_ref     : (1, EMB_DIM)            f32    BN-folded bias
    # w_cls_ref : (EMB_DIM, NUM_CLASSES)  bf16   pre-normalized class weight^T
    # out_ref   : (TB, NUM_CLASSES)       f32    cosine logits

    # In-kernel cast to bf16 (VPU filler) instead of a host-materialized copy.
    x = x_ref[...].astype(jnp.bfloat16)

    # embedding_head Linear + folded BatchNorm1d (inference), f32 accumulate.
    emb = jnp.dot(x, w_emb_ref[...],
                  preferred_element_type=jnp.float32)           # (TB, 128)
    bn = emb + b_ref[...]

    # F.normalize(features): x / max(||x||, eps) == x * rsqrt(max(sumsq, eps^2))
    sumsq = jnp.sum(bn * bn, axis=-1, keepdims=True)
    inv_norm = jax.lax.rsqrt(jnp.maximum(sumsq, NORM_EPS * NORM_EPS))
    feat_n = (bn * inv_norm).astype(w_cls_ref.dtype)            # (TB, 128) bf16

    # logits = norm_features @ norm_weight^T (weight already normalized + T'd)
    out_ref[...] = jnp.dot(feat_n, w_cls_ref[...],
                           preferred_element_type=jnp.float32)  # (TB, C)


def audio_classifier_am_forward(x_nchw, params, *, max_tile=MAX_TB):
    """x_nchw: backbone feature map (B, 2048, 1, 1) -> logits (B, num_classes)."""
    B = x_nchw.shape[0]
    # torch.flatten(x, 1): contiguous trailing unit dims -> metadata-only reshape.
    x = x_nchw.reshape(B, FEAT_DIM)

    # --- one-time weight prep (plain XLA, outside the per-tile body) ---
    # Fold BatchNorm1d (running stats) and the Linear bias into W / b:
    #   bn(xW + b) = x (W * s) + ((b - mean) * s + beta),  s = gamma / sqrt(var+eps)
    scale = params["gamma"] / jnp.sqrt(params["var"] + BN_EPS)          # (1, EMB)
    w_emb_folded = (params["w_emb"] * scale).astype(jnp.bfloat16)       # (FEAT, EMB)
    b_folded = ((params["b_emb"] - params["mean"]) * scale
                + params["beta"]).astype(jnp.float32)                   # (1, EMB)

    # Pre-normalize the classifier weight and transpose to (EMB, C).
    w_cls = params["w_cls"]
    w_cls_n = w_cls / jnp.maximum(
        jnp.linalg.norm(w_cls, axis=-1, keepdims=True), NORM_EPS)
    w_cls_t = jnp.transpose(w_cls_n).astype(jnp.bfloat16)               # (EMB, C)

    # --- batch tiling: balanced tiles, no host padding (ragged tile masked) ---
    tb = _choose_batch_tile(B, max_tile)
    grid = (pl.cdiv(B, tb),)

    in_itemsize = jnp.dtype(x.dtype).itemsize
    flops = 2 * B * FEAT_DIM * EMB_DIM + 2 * B * EMB_DIM * NUM_CLASSES
    bytes_accessed = (B * FEAT_DIM * in_itemsize      # x stream (native dtype)
                      + FEAT_DIM * EMB_DIM * 2        # folded embedding weight
                      + EMB_DIM * 4                   # folded bias
                      + EMB_DIM * NUM_CLASSES * 2     # normalized class weight
                      + B * NUM_CLASSES * 4)          # logits out (f32)

    out = pl.pallas_call(
        _head_kernel,
        out_shape=jax.ShapeDtypeStruct((B, NUM_CLASSES), jnp.float32),
        grid=grid,
        in_specs=[
            pl.BlockSpec((tb, FEAT_DIM), lambda i: (i, 0)),             # x tile
            pl.BlockSpec((FEAT_DIM, EMB_DIM), lambda i: (0, 0)),        # pinned
            pl.BlockSpec((1, EMB_DIM), lambda i: (0, 0)),               # pinned
            pl.BlockSpec((EMB_DIM, NUM_CLASSES), lambda i: (0, 0)),     # pinned
        ],
        out_specs=pl.BlockSpec((tb, NUM_CLASSES), lambda i: (i, 0)),
        compiler_params=pltpu.CompilerParams(
            dimension_semantics=("parallel",),      # shard batch tiles across TCs
            vmem_limit_bytes=32 << 20,              # covers ~20 MiB peak; > v5e default
        ),
        cost_estimate=pl.CostEstimate(
            flops=flops, transcendentals=B, bytes_accessed=bytes_accessed),
    )(x, w_emb_folded, b_folded, w_cls_t)

    return out


def _reference_forward(x_nchw, p):
    """Pure-JAX f32 reference of the PyTorch head (for correctness check)."""
    x = x_nchw.reshape(x_nchw.shape[0], -1).astype(jnp.float32)
    emb = x @ p["w_emb"] + p["b_emb"]
    bn = (emb - p["mean"]) / jnp.sqrt(p["var"] + BN_EPS) * p["gamma"] + p["beta"]
    feat_n = bn / jnp.maximum(
        jnp.linalg.norm(bn, axis=-1, keepdims=True), NORM_EPS)
    w_n = p["w_cls"] / jnp.maximum(
        jnp.linalg.norm(p["w_cls"], axis=-1, keepdims=True), NORM_EPS)
    return feat_n @ w_n.T


def make_params(key):
    k1, k2, k3 = jax.random.split(key, 3)
    # embedding_head: nn.Linear(2048, 128), stored (in, out)
    w_emb = (jax.random.normal(k1, (FEAT_DIM, EMB_DIM), jnp.float32)
             * (1.0 / jnp.sqrt(FEAT_DIM)))
    b_emb = jnp.zeros((1, EMB_DIM), jnp.float32)
    # BatchNorm1d(128) params / running stats (inference)
    gamma = jnp.ones((1, EMB_DIM), jnp.float32)
    beta = jnp.zeros((1, EMB_DIM), jnp.float32)
    mean = 0.01 * jax.random.normal(k2, (1, EMB_DIM), jnp.float32)
    var = jnp.ones((1, EMB_DIM), jnp.float32)
    # self.weight = normal(0, 0.01, (num_classes, embedding_size))
    w_cls = 0.01 * jax.random.normal(k3, (NUM_CLASSES, EMB_DIM), jnp.float32)
    return dict(w_emb=w_emb, b_emb=b_emb, gamma=gamma, beta=beta,
                mean=mean, var=var, w_cls=w_cls)


if __name__ == "__main__":
    key = jax.random.PRNGKey(0)
    k_x, k_x2, k_p = jax.random.split(key, 3)
    params = make_params(k_p)

    # Backbone (truncated ResNet-101 + avgpool) output: (B, 2048, 1, 1) NCHW.
    B = 2
    x = jax.random.normal(k_x, (B, FEAT_DIM, 1, 1), jnp.float32)
    logits = jax.block_until_ready(audio_classifier_am_forward(x, params))
    ref = _reference_forward(x, params)
    assert logits.shape == (B, NUM_CLASSES)
    # bf16 operands on the memory-dominant path -> tolerance loosened vs f32 ref.
    assert jnp.allclose(logits, ref, atol=2e-2, rtol=0.0), "mismatch vs reference"

    # Multi-tile path: two balanced tiles (32 + ragged 8) -> exercises the
    # pad-free ragged-last-tile handling and the >=2-tile v7x sharding policy.
    B2 = 40
    x2 = jax.random.normal(k_x2, (B2, FEAT_DIM, 1, 1), jnp.float32)
    logits2 = jax.block_until_ready(audio_classifier_am_forward(x2, params))
    ref2 = _reference_forward(x2, params)
    assert logits2.shape == (B2, NUM_CLASSES)
    assert jnp.allclose(logits2, ref2, atol=2e-2, rtol=0.0), "mismatch (ragged tile)"

    print("KERNEL_OK")
</pallas_src>

<mosaic_0001>
module attributes {stable_mosaic.version = 11 : i64} {
  func.func @_head_kernel(%arg0: i32, %arg1: memref<2x2048xf32, #tpu.memory_space<vmem>>, %arg2: memref<2048x128xbf16, #tpu.memory_space<vmem>>, %arg3: memref<1x128xf32, #tpu.memory_space<vmem>>, %arg4: memref<128x256xbf16, #tpu.memory_space<vmem>>, %arg5: memref<2x256xf32, #tpu.memory_space<vmem>>) attributes {dimension_semantics = [#tpu.dimension_semantics<parallel>], iteration_bounds = array<i64: 1>, scalar_prefetch = 0 : i64, scratch_operands = 0 : i64, tpu.core_type = #tpu.core_type<tc>, window_params = [{transform_indices = @transform_0, window_bounds = array<i64: 2, 2048>}, {pipeline_mode = #tpu.pipeline_mode<synchronous>, transform_indices = @transform_1, window_bounds = array<i64: 2048, 128>}, {pipeline_mode = #tpu.pipeline_mode<synchronous>, transform_indices = @transform_2, window_bounds = array<i64: 1, 128>}, {pipeline_mode = #tpu.pipeline_mode<synchronous>, transform_indices = @transform_3, window_bounds = array<i64: 128, 256>}, {transform_indices = @transform_4, window_bounds = array<i64: 2, 256>}]} {
    %c0 = arith.constant 0 : index
    %c0_0 = arith.constant 0 : index
    %0 = vector.load %arg1[%c0, %c0_0] : memref<2x2048xf32, #tpu.memory_space<vmem>>, vector<2x2048xf32>
    %1 = arith.truncf %0 : vector<2x2048xf32> to vector<2x2048xbf16>
    %c0_1 = arith.constant 0 : index
    %c0_2 = arith.constant 0 : index
    %2 = vector.load %arg2[%c0_1, %c0_2] : memref<2048x128xbf16, #tpu.memory_space<vmem>>, vector<2048x128xbf16>
    %cst = arith.constant dense<0.000000e+00> : vector<2x128xf32>
    %3 = tpu.matmul %1, %2, %cst {dimension_numbers = #tpu.dot_dimension_numbers<[1], [0], [0], [1], [0, 0, 1, 1], [], []>} : vector<2x2048xbf16>, vector<2048x128xbf16>, vector<2x128xf32> -> vector<2x128xf32>
    %c0_3 = arith.constant 0 : index
    %c0_4 = arith.constant 0 : index
    %4 = vector.load %arg3[%c0_3, %c0_4] : memref<1x128xf32, #tpu.memory_space<vmem>>, vector<1x128xf32>
    %5 = vector.broadcast %4 : vector<1x128xf32> to vector<2x128xf32>
    %6 = arith.addf %3, %5 : vector<2x128xf32>
    %7 = arith.mulf %6, %6 : vector<2x128xf32>
    %cst_5 = arith.constant dense<0.000000e+00> : vector<2xf32>
    %8 = vector.multi_reduction <add>, %7, %cst_5 [1] : vector<2x128xf32> to vector<2xf32>
    %9 = vector.shape_cast %8 : vector<2xf32> to vector<2x1xf32>
    %cst_6 = arith.constant 1.000000e-24 : f32
    %10 = vector.broadcast %cst_6 : f32 to vector<2x1xf32>
    %11 = arith.maximumf %9, %10 : vector<2x1xf32>
    %12 = math.rsqrt %11 : vector<2x1xf32>
    %13 = vector.broadcast %12 : vector<2x1xf32> to vector<2x128xf32>
    %14 = arith.mulf %6, %13 : vector<2x128xf32>
    %15 = arith.truncf %14 : vector<2x128xf32> to vector<2x128xbf16>
    %c0_7 = arith.constant 0 : index
    %c0_8 = arith.constant 0 : index
    %16 = vector.load %arg4[%c0_7, %c0_8] : memref<128x256xbf16, #tpu.memory_space<vmem>>, vector<128x256xbf16>
    %cst_9 = arith.constant dense<0.000000e+00> : vector<2x256xf32>
    %17 = tpu.matmul %15, %16, %cst_9 {dimension_numbers = #tpu.dot_dimension_numbers<[1], [0], [0], [1], [0, 0, 1, 1], [], []>} : vector<2x128xbf16>, vector<128x256xbf16>, vector<2x256xf32> -> vector<2x256xf32>
    %c0_10 = arith.constant 0 : index
    %c0_11 = arith.constant 0 : index
    %18 = vector.load %arg5[%c0_10, %c0_11] : memref<2x256xf32, #tpu.memory_space<vmem>>, vector<2x256xf32>
    tpu.vector_store %arg5[%c0_10, %c0_11], %17 {strides = array<i32>} : memref<2x256xf32, #tpu.memory_space<vmem>>, vector<2x256xf32>,
    return
  }
  func.func @transform_0(%arg0: i32) -> (i32, i32) {
    %c0_i32 = arith.constant 0 : i32
    %c0_i32_0 = arith.constant 0 : i32
    return %arg0, %c0_i32 : i32, i32
  }
  func.func @transform_1(%arg0: i32) -> (i32, i32) {
    %c0_i32 = arith.constant 0 : i32
    %c0_i32_0 = arith.constant 0 : i32
    %c0_i32_1 = arith.constant 0 : i32
    return %c0_i32, %c0_i32_0 : i32, i32
  }
  func.func @transform_2(%arg0: i32) -> (i32, i32) {
    %c0_i32 = arith.constant 0 : i32
    %c0_i32_0 = arith.constant 0 : i32
    %c0_i32_1 = arith.constant 0 : i32
    return %c0_i32, %c0_i32_0 : i32, i32
  }
  func.func @transform_3(%arg0: i32) -> (i32, i32) {
    %c0_i32 = arith.constant 0 : i32
    %c0_i32_0 = arith.constant 0 : i32
    %c0_i32_1 = arith.constant 0 : i32
    return %c0_i32, %c0_i32_0 : i32, i32
  }
  func.func @transform_4(%arg0: i32) -> (i32, i32) {
    %c0_i32 = arith.constant 0 : i32
    %c0_i32_0 = arith.constant 0 : i32
    return %arg0, %c0_i32 : i32, i32
  }
}

</mosaic_0001>

<llo_original>
// kernel: tpu_custom_call.1
$region0: #{tpu_custom_call.1}
  #allocation0 [shape = 'u32[]', space=smem, size = 0x4, offset = 0x4, fixed_abs, tag = 'smem constant byte address 0x4 - core index']
  #allocation1 [shape = 'u32[144,128]{1,0:T(1,128)}', space=vmem, size = 0x12000, scoped, tag = 'internal scratch']
  %s0 = inlined_call_operand.hbm [shape: f32[2,2048], index: 0, kind: input, shape index: {}]
  %s1 = inlined_call_operand.hbm [shape: bf16[2048,128], index: 1, kind: input, shape index: {}]
  %s2 = inlined_call_operand.vmem [shape: f32[1,128], index: 2, kind: input, shape index: {}]
  %s3 = inlined_call_operand.hbm [shape: bf16[128,256], index: 3, kind: input, shape index: {}]
  %s4 = inlined_call_operand.hbm [shape: f32[2,256], index: 4, kind: output, shape index: {}]
  %s5 = sld [smem:[#allocation0]]
  $region38: #{tpu_custom_call.1} parent=0
    _
  %s7 = ssub.s32 1, %s5
  %s8 = scalar_select 0, %s7, %s5
  $region1: #{tpu_custom_call.1} parent=0
    #allocation2 [shape = 'u8[16384]{0}', space=vmem, size = 0x4000, scoped, tag = 'input window, operand 0, single buffered']
    #allocation3 [shape = 's32[1]{0}', space=sflag, size = 0x4, scoped, tag = 'scoped memory for tpu_custom_call.1']
    #allocation4 [shape = 's32[1]{0}', space=sflag, size = 0x4, scoped, tag = 'scoped memory for tpu_custom_call.1']
    #allocation5 [shape = 'u8[524288]{0}', space=vmem, size = 0x80000, scoped, tag = 'input window, operand 1, single buffered']
    #allocation6 [shape = 's32[1]{0}', space=sflag, size = 0x4, scoped, tag = 'scoped memory for tpu_custom_call.1']
    #allocation7 [shape = 'u8[65536]{0}', space=vmem, size = 0x10000, scoped, tag = 'input window, operand 3, single buffered']
    #allocation8 [shape = 'u8[2048]{0}', space=vmem, size = 0x800, scoped, tag = 'output window, operand 0, single buffered']
    %9 = vsyncpa [#allocation3], 0
    %10 = vsyncpa [#allocation6], 0
    %11 = vsyncpa [#allocation4], 0
    // Predicated region
    $region2: #{tpu_custom_call.1} parent=1 // pred_check
      _
    $region3: #{tpu_custom_call.1} parent=1 // pred_check_branch
      %13 = sbr.rel (0) target = $region5
    $region4: #{tpu_custom_call.1} parent=1 // pred_region
      %s15 = ssub.s32 512, 512
      %16 = vsyncadd [#allocation3], %s15
      %s18 = sshll.u32 [#allocation2], 4
      %s19 = int_to_ptr.vmem [resolvable:$true] %s18
      %21 = dma.hbm_to_vmem [thread:$0]  %s0, 512, %s19, [#allocation3]
    $region5: #{tpu_custom_call.1} parent=1 // pred_fallthru
      _
    // Predicated region
    $region6: #{tpu_custom_call.1} parent=1 // pred_check
      _
    $region7: #{tpu_custom_call.1} parent=1 // pred_check_branch
      %23 = sbr.rel (0) target = $region9
    $region8: #{tpu_custom_call.1} parent=1 // pred_region
      %s25 = ssub.s32 16384, 16384
      %26 = vsyncadd [#allocation6], %s25
      %s27 = sshll.u32 [#allocation5], 4
      %s28 = int_to_ptr.vmem [resolvable:$true] %s27
      %33 = dma.hbm_to_vmem [thread:$0]  %s1, 16384, %s28, [#allocation6], 64, 64, 4
    $region9: #{tpu_custom_call.1} parent=1 // pred_fallthru
      _
    // Predicated region
    $region10: #{tpu_custom_call.1} parent=1 // pred_check
      _
    $region11: #{tpu_custom_call.1} parent=1 // pred_check_branch
      %35 = sbr.rel (0) target = $region13
    $region12: #{tpu_custom_call.1} parent=1 // pred_region
      _
    $region13: #{tpu_custom_call.1} parent=1 // pred_fallthru
      _
    // Predicated region
    $region14: #{tpu_custom_call.1} parent=1 // pred_check
      _
    $region15: #{tpu_custom_call.1} parent=1 // pred_check_branch
      %37 = sbr.rel (0) target = $region17
    $region16: #{tpu_custom_call.1} parent=1 // pred_region
      %s39 = ssub.s32 2048, 2048
      %40 = vsyncadd [#allocation6], %s39
      %s41 = sshll.u32 [#allocation7], 4
      %s42 = int_to_ptr.vmem [resolvable:$true] %s41
      %47 = dma.hbm_to_vmem [thread:$0]  %s3, 2048, %s42, [#allocation6], 128, 128, 8
    $region17: #{tpu_custom_call.1} parent=1 // pred_fallthru
      _
    // Predicated region
    $region18: #{tpu_custom_call.1} parent=1 // pred_check
      _
    $region19: #{tpu_custom_call.1} parent=1 // pred_check_branch
      %49 = sbr.rel (0) target = $region21
    $region20: #{tpu_custom_call.1} parent=1 // pred_region
      %50 = dma.done [#allocation3], 512
    $region21: #{tpu_custom_call.1} parent=1 // pred_fallthru
      _
    // Predicated region
    $region22: #{tpu_custom_call.1} parent=1 // pred_check
      _
    $region23: #{tpu_custom_call.1} parent=1 // pred_check_branch
      %52 = sbr.rel (0) target = $region25
    $region24: #{tpu_custom_call.1} parent=1 // pred_region
      %53 = dma.done [#allocation6], 16384
    $region25: #{tpu_custom_call.1} parent=1 // pred_fallthru
      _
    // Predicated region
    $region26: #{tpu_custom_call.1} parent=1 // pred_check
      _
    $region27: #{tpu_custom_call.1} parent=1 // pred_check_branch
      %55 = sbr.rel (0) target = $region29
    $region28: #{tpu_custom_call.1} parent=1 // pred_region
      %56 = dma.done [#allocation6], 2048
    $region29: #{tpu_custom_call.1} parent=1 // pred_fallthru
      _
    %v58 = vld [vmem:[#allocation2] sm:$0xff]
    %v59 = vld [vmem:[#allocation2 + $0x8] sm:$0xff]
    %v60 = vld [vmem:[#allocation2 + $0x10] sm:$0xff]
    %v61 = vld [vmem:[#allocation2 + $0x18] sm:$0xff]
    %v66 = vcombine.high %v58, %v58
    %v68 = vunpack.c.l.s4 1983009808
    %v69 = vunpack.c.0.s8 %v68
    %v70 = vlaneseq
    %v71 = vshrl.u32 %v70, 7
    %v72 = vsub.s32 %v69, %v71
    %v73 = vrot.slane %v58, %v72
    %v75 = vunpack.c.l.s4 1983009808
    %v76 = vunpack.c.0.s8 %v75
    %v77 = vlaneseq
    %v78 = vshrl.u32 %v77, 7
    %v79 = vsub.s32 %v76, %v78
    %v80 = vrot.slane %v66, %v79
    %v81 = vcombine.high %v73, %v73
    %v82 = vcombine.high %v80, %v80
    %v83 = vcombine.high %v59, %v59
    %v85 = vunpack.c.l.s4 1983009808
    %v86 = vunpack.c.0.s8 %v85
    %v87 = vlaneseq
    %v88 = vshrl.u32 %v87, 7
    %v89 = vsub.s32 %v86, %v88
    %v90 = vrot.slane %v59, %v89
    %v92 = vunpack.c.l.s4 1983009808
    %v93 = vunpack.c.0.s8 %v92
    %v94 = vlaneseq
    %v95 = vshrl.u32 %v94, 7
    %v96 = vsub.s32 %v93, %v95
    %v97 = vrot.slane %v83, %v96
    %v98 = vcombine.high %v90, %v90
    %v99 = vcombine.high %v97, %v97
    %v100 = vcombine.high %v60, %v60
    %v102 = vunpack.c.l.s4 1983009808
    %v103 = vunpack.c.0.s8 %v102
    %v104 = vlaneseq
    %v105 = vshrl.u32 %v104, 7
    %v106 = vsub.s32 %v103, %v105
    %v107 = vrot.slane %v60, %v106
    %v109 = vunpack.c.l.s4 1983009808
    %v110 = vunpack.c.0.s8 %v109
    %v111 = vlaneseq
    %v112 = vshrl.u32 %v111, 7
    %v113 = vsub.s32 %v110, %v112
    %v114 = vrot.slane %v100, %v113
    %v115 = vcombine.high %v107, %v107
    %v116 = vcombine.high %v114, %v114
    %v117 = vcombine.high %v61, %v61
    %v119 = vunpack.c.l.s4 1983009808
    %v120 = vunpack.c.0.s8 %v119
    %v121 = vlaneseq
    %v122 = vshrl.u32 %v121, 7
    %v123 = vsub.s32 %v120, %v122
    %v124 = vrot.slane %v61, %v123
    %v126 = vunpack.c.l.s4 1983009808
    %v127 = vunpack.c.0.s8 %v126
    %v128 = vlaneseq
    %v129 = vshrl.u32 %v128, 7
    %v130 = vsub.s32 %v127, %v129
    %v131 = vrot.slane %v117, %v130
    %v132 = vcombine.high %v124, %v124
    %v133 = vcombine.high %v131, %v131
    %v150 = vpack.c.bf16 %v73, %v73
    %v151 = vpack.c.bf16 %v81, %v81
    %v152 = vpack.c.bf16 %v80, %v80
    %v153 = vpack.c.bf16 %v82, %v82
    %v154 = vpack.c.bf16 %v90, %v90
    %v155 = vpack.c.bf16 %v98, %v98
    %v156 = vpack.c.bf16 %v97, %v97
    %v157 = vpack.c.bf16 %v99, %v99
    %v158 = vpack.c.bf16 %v107, %v107
    %v159 = vpack.c.bf16 %v115, %v115
    %v160 = vpack.c.bf16 %v114, %v114
    %v161 = vpack.c.bf16 %v116, %v116
    %v162 = vpack.c.bf16 %v124, %v124
    %v163 = vpack.c.bf16 %v132, %v132
    %v164 = vpack.c.bf16 %v131, %v131
    %v165 = vpack.c.bf16 %v133, %v133
    %v166 = vld [vmem:[#allocation5] sm:$0xf]
    %v167 = vld [vmem:[#allocation5 + $0x4] sm:$0xf]
    %v168 = vld [vmem:[#allocation5 + $0x8] sm:$0xf]
    %v169 = vld [vmem:[#allocation5 + $0xc] sm:$0xf]
    %v170 = vld [vmem:[#allocation5 + $0x10] sm:$0xf]
    %v171 = vld [vmem:[#allocation5 + $0x14] sm:$0xf]
    %v172 = vld [vmem:[#allocation5 + $0x18] sm:$0xf]
    %v173 = vld [vmem:[#allocation5 + $0x1c] sm:$0xf]
    %v174 = vld [vmem:[#allocation5 + $0x20] sm:$0xf]
    %v175 = vld [vmem:[#allocation5 + $0x24] sm:$0xf]
    %v176 = vld [vmem:[#allocation5 + $0x28] sm:$0xf]
    %v177 = vld [vmem:[#allocation5 + $0x2c] sm:$0xf]
    %v178 = vld [vmem:[#allocation5 + $0x30] sm:$0xf]
    %v179 = vld [vmem:[#allocation5 + $0x34] sm:$0xf]
    %v180 = vld [vmem:[#allocation5 + $0x38] sm:$0xf]
    %v181 = vld [vmem:[#allocation5 + $0x3c] sm:$0xf]
    %v182 = vld [vmem:[#allocation5 + $0x40] sm:$0xf]
    %v183 = vld [vmem:[#allocation5 + $0x44] sm:$0xf]
    %v184 = vld [vmem:[#allocation5 + $0x48] sm:$0xf]
    %v185 = vld [vmem:[#allocation5 + $0x4c] sm:$0xf]
    %v186 = vld [vmem:[#allocation5 + $0x50] sm:$0xf]
    %v187 = vld [vmem:[#allocation5 + $0x54] sm:$0xf]
    %v188 = vld [vmem:[#allocation5 + $0x58] sm:$0xf]
    %v189 = vld [vmem:[#allocation5 + $0x5c] sm:$0xf]
    %v190 = vld [vmem:[#allocation5 + $0x60] sm:$0xf]
    %v191 = vld [vmem:[#allocation5 + $0x64] sm:$0xf]
    %v192 = vld [vmem:[#allocation5 + $0x68] sm:$0xf]
    %v193 = vld [vmem:[#allocation5 + $0x6c] sm:$0xf]
    %v194 = vld [vmem:[#allocation5 + $0x70] sm:$0xf]
    %v195 = vld [vmem:[#allocation5 + $0x74] sm:$0xf]
    %v196 = vld [vmem:[#allocation5 + $0x78] sm:$0xf]
    %v197 = vld [vmem:[#allocation5 + $0x7c] sm:$0xf]
    %v198 = vld [vmem:[#allocation5 + $0x80] sm:$0xf]
    %v199 = vld [vmem:[#allocation5 + $0x84] sm:$0xf]
    %v200 = vld [vmem:[#allocation5 + $0x88] sm:$0xf]
    %v201 = vld [vmem:[#allocation5 + $0x8c] sm:$0xf]
    %v202 = vld [vmem:[#allocation5 + $0x90] sm:$0xf]
    %v203 = vld [vmem:[#allocation5 + $0x94] sm:$0xf]
    %v204 = vld [vmem:[#allocation5 + $0x98] sm:$0xf]
    %v205 = vld [vmem:[#allocation5 + $0x9c] sm:$0xf]
    %v206 = vld [vmem:[#allocation5 + $0xa0] sm:$0xf]
    %v207 = vld [vmem:[#allocation5 + $0xa4] sm:$0xf]
    %v208 = vld [vmem:[#allocation5 + $0xa8] sm:$0xf]
    %v209 = vld [vmem:[#allocation5 + $0xac] sm:$0xf]
    %v210 = vld [vmem:[#allocation5 + $0xb0] sm:$0xf]
    %v211 = vld [vmem:[#allocation5 + $0xb4] sm:$0xf]
    %v212 = vld [vmem:[#allocation5 + $0xb8] sm:$0xf]
    %v213 = vld [vmem:[#allocation5 + $0xbc] sm:$0xf]
    %v214 = vld [vmem:[#allocation5 + $0xc0] sm:$0xf]
    %v215 = vld [vmem:[#allocation5 + $0xc4] sm:$0xf]
    %v216 = vld [vmem:[#allocation5 + $0xc8] sm:$0xf]
    %v217 = vld [vmem:[#allocation5 + $0xcc] sm:$0xf]
    %v218 = vld [vmem:[#allocation5 + $0xd0] sm:$0xf]
    %v219 = vld [vmem:[#allocation5 + $0xd4] sm:$0xf]
    %v220 = vld [vmem:[#allocation5 + $0xd8] sm:$0xf]
    %v221 = vld [vmem:[#allocation5 + $0xdc] sm:$0xf]
    %v222 = vld [vmem:[#allocation5 + $0xe0] sm:$0xf]
    %v223 = vld [vmem:[#allocation5 + $0xe4] sm:$0xf]
    %v224 = vld [vmem:[#allocation5 + $0xe8] sm:$0xf]
    %v225 = vld [vmem:[#allocation5 + $0xec] sm:$0xf]
    %v226 = vld [vmem:[#allocation5 + $0xf0] sm:$0xf]
    %v227 = vld [vmem:[#allocation5 + $0xf4] sm:$0xf]
    %v228 = vld [vmem:[#allocation5 + $0xf8] sm:$0xf]
    %v229 = vld [vmem:[#allocation5 + $0xfc] sm:$0xf]
    %v230 = vld [vmem:[#allocation5 + $0x100] sm:$0xf]
    %v231 = vld [vmem:[#allocation5 + $0x104] sm:$0xf]
    %v232 = vld [vmem:[#allocation5 + $0x108] sm:$0xf]
    %v233 = vld [vmem:[#allocation5 + $0x10c] sm:$0xf]
    %v234 = vld [vmem:[#allocation5 + $0x110] sm:$0xf]
    %v235 = vld [vmem:[#allocation5 + $0x114] sm:$0xf]
    %v236 = vld [vmem:[#allocation5 + $0x118] sm:$0xf]
    %v237 = vld [vmem:[#allocation5 + $0x11c] sm:$0xf]
    %v238 = vld [vmem:[#allocation5 + $0x120] sm:$0xf]
    %v239 = vld [vmem:[#allocation5 + $0x124] sm:$0xf]
    %v240 = vld [vmem:[#allocation5 + $0x128] sm:$0xf]
    %v241 = vld [vmem:[#allocation5 + $0x12c] sm:$0xf]
    %v242 = vld [vmem:[#allocation5 + $0x130] sm:$0xf]
    %v243 = vld [vmem:[#allocation5 + $0x134] sm:$0xf]
    %v244 = vld [vmem:[#allocation5 + $0x138] sm:$0xf]
    %v245 = vld [vmem:[#allocation5 + $0x13c] sm:$0xf]
    %v246 = vld [vmem:[#allocation5 + $0x140] sm:$0xf]
    %v247 = vld [vmem:[#allocation5 + $0x144] sm:$0xf]
    %v248 = vld [vmem:[#allocation5 + $0x148] sm:$0xf]
    %v249 = vld [vmem:[#allocation5 + $0x14c] sm:$0xf]
    %v250 = vld [vmem:[#allocation5 + $0x150] sm:$0xf]
    %v251 = vld [vmem:[#allocation5 + $0x154] sm:$0xf]
    %v252 = vld [vmem:[#allocation5 + $0x158] sm:$0xf]
    %v253 = vld [vmem:[#allocation5 + $0x15c] sm:$0xf]
    %v254 = vld [vmem:[#allocation5 + $0x160] sm:$0xf]
    %v255 = vld [vmem:[#allocation5 + $0x164] sm:$0xf]
    %v256 = vld [vmem:[#allocation5 + $0x168] sm:$0xf]
    %v257 = vld [vmem:[#allocation5 + $0x16c] sm:$0xf]
    %v258 = vld [vmem:[#allocation5 + $0x170] sm:$0xf]
    %v259 = vld [vmem:[#allocation5 + $0x174] sm:$0xf]
    %v260 = vld [vmem:[#allocation5 + $0x178] sm:$0xf]
    %v261 = vld [vmem:[#allocation5 + $0x17c] sm:$0xf]
    %v262 = vld [vmem:[#allocation5 + $0x180] sm:$0xf]
    %v263 = vld [vmem:[#allocation5 + $0x184] sm:$0xf]
    %v264 = vld [vmem:[#allocation5 + $0x188] sm:$0xf]
    %v265 = vld [vmem:[#allocation5 + $0x18c] sm:$0xf]
    %v266 = vld [vmem:[#allocation5 + $0x190] sm:$0xf]
    %v267 = vld [vmem:[#allocation5 + $0x194] sm:$0xf]
    %v268 = vld [vmem:[#allocation5 + $0x198] sm:$0xf]
    %v269 = vld [vmem:[#allocation5 + $0x19c] sm:$0xf]
    %v270 = vld [vmem:[#allocation5 + $0x1a0] sm:$0xf]
    %v271 = vld [vmem:[#allocation5 + $0x1a4] sm:$0xf]
    %v272 = vld [vmem:[#allocation5 + $0x1a8] sm:$0xf]
    %v273 = vld [vmem:[#allocation5 + $0x1ac] sm:$0xf]
    %v274 = vld [vmem:[#allocation5 + $0x1b0] sm:$0xf]
    %v275 = vld [vmem:[#allocation5 + $0x1b4] sm:$0xf]
    %v276 = vld [vmem:[#allocation5 + $0x1b8] sm:$0xf]
    %v277 = vld [vmem:[#allocation5 + $0x1bc] sm:$0xf]
    %v278 = vld [vmem:[#allocation5 + $0x1c0] sm:$0xf]
    %v279 = vld [vmem:[#allocation5 + $0x1c4] sm:$0xf]
    %v280 = vld [vmem:[#allocation5 + $0x1c8] sm:$0xf]
    %v281 = vld [vmem:[#allocation5 + $0x1cc] sm:$0xf]
    %v282 = vld [vmem:[#allocation5 + $0x1d0] sm:$0xf]
    %v283 = vld [vmem:[#allocation5 + $0x1d4] sm:$0xf]
    %v284 = vld [vmem:[#allocation5 + $0x1d8] sm:$0xf]
    %v285 = vld [vmem:[#allocation5 + $0x1dc] sm:$0xf]
    %v286 = vld [vmem:[#allocation5 + $0x1e0] sm:$0xf]
    %v287 = vld [vmem:[#allocation5 + $0x1e4] sm:$0xf]
    %v288 = vld [vmem:[#allocation5 + $0x1e8] sm:$0xf]
    %v289 = vld [vmem:[#allocation5 + $0x1ec] sm:$0xf]
    %v290 = vld [vmem:[#allocation5 + $0x1f0] sm:$0xf]
    %v291 = vld [vmem:[#allocation5 + $0x1f4] sm:$0xf]
    %v292 = vld [vmem:[#allocation5 + $0x1f8] sm:$0xf]
    %v293 = vld [vmem:[#allocation5 + $0x1fc] sm:$0xf]
    %v294 = vld [vmem:[#allocation5 + $0x200] sm:$0xf]
    %v295 = vld [vmem:[#allocation5 + $0x204] sm:$0xf]
    %v296 = vld [vmem:[#allocation5 + $0x208] sm:$0xf]
    %v297 = vld [vmem:[#allocation5 + $0x20c] sm:$0xf]
    %v298 = vld [vmem:[#allocation5 + $0x210] sm:$0xf]
    %v299 = vld [vmem:[#allocation5 + $0x214] sm:$0xf]
    %v300 = vld [vmem:[#allocation5 + $0x218] sm:$0xf]
    %v301 = vld [vmem:[#allocation5 + $0x21c] sm:$0xf]
    %v302 = vld [vmem:[#allocation5 + $0x220] sm:$0xf]
    %v303 = vld [vmem:[#allocation5 + $0x224] sm:$0xf]
    %v304 = vld [vmem:[#allocation5 + $0x228] sm:$0xf]
    %v305 = vld [vmem:[#allocation5 + $0x22c] sm:$0xf]
    %v306 = vld [vmem:[#allocation5 + $0x230] sm:$0xf]
    %v307 = vld [vmem:[#allocation5 + $0x234] sm:$0xf]
    %v308 = vld [vmem:[#allocation5 + $0x238] sm:$0xf]
    %v309 = vld [vmem:[#allocation5 + $0x23c] sm:$0xf]
    %v310 = vld [vmem:[#allocation5 + $0x240] sm:$0xf]
    %v311 = vld [vmem:[#allocation5 + $0x244] sm:$0xf]
    %v312 = vld [vmem:[#allocation5 + $0x248] sm:$0xf]
    %v313 = vld [vmem:[#allocation5 + $0x24c] sm:$0xf]
    %v314 = vld [vmem:[#allocation5 + $0x250] sm:$0xf]
    %v315 = vld [vmem:[#allocation5 + $0x254] sm:$0xf]
    %v316 = vld [vmem:[#allocation5 + $0x258] sm:$0xf]
    %v317 = vld [vmem:[#allocation5 + $0x25c] sm:$0xf]
    %v318 = vld [vmem:[#allocation5 + $0x260] sm:$0xf]
    %v319 = vld [vmem:[#allocation5 + $0x264] sm:$0xf]
    %v320 = vld [vmem:[#allocation5 + $0x268] sm:$0xf]
    %v321 = vld [vmem:[#allocation5 + $0x26c] sm:$0xf]
    %v322 = vld [vmem:[#allocation5 + $0x270] sm:$0xf]
    %v323 = vld [vmem:[#allocation5 + $0x274] sm:$0xf]
    %v324 = vld [vmem:[#allocation5 + $0x278] sm:$0xf]
    %v325 = vld [vmem:[#allocation5 + $0x27c] sm:$0xf]
    %v326 = vld [vmem:[#allocation5 + $0x280] sm:$0xf]
    %v327 = vld [vmem:[#allocation5 + $0x284] sm:$0xf]
    %v328 = vld [vmem:[#allocation5 + $0x288] sm:$0xf]
    %v329 = vld [vmem:[#allocation5 + $0x28c] sm:$0xf]
    %v330 = vld [vmem:[#allocation5 + $0x290] sm:$0xf]
    %v331 = vld [vmem:[#allocation5 + $0x294] sm:$0xf]
    %v332 = vld [vmem:[#allocation5 + $0x298] sm:$0xf]
    %v333 = vld [vmem:[#allocation5 + $0x29c] sm:$0xf]
    %v334 = vld [vmem:[#allocation5 + $0x2a0] sm:$0xf]
    %v335 = vld [vmem:[#allocation5 + $0x2a4] sm:$0xf]
    %v336 = vld [vmem:[#allocation5 + $0x2a8] sm:$0xf]
    %v337 = vld [vmem:[#allocation5 + $0x2ac] sm:$0xf]
    %v338 = vld [vmem:[#allocation5 + $0x2b0] sm:$0xf]
    %v339 = vld [vmem:[#allocation5 + $0x2b4] sm:$0xf]
    %v340 = vld [vmem:[#allocation5 + $0x2b8] sm:$0xf]
    %v341 = vld [vmem:[#allocation5 + $0x2bc] sm:$0xf]
    %v342 = vld [vmem:[#allocation5 + $0x2c0] sm:$0xf]
    %v343 = vld [vmem:[#allocation5 + $0x2c4] sm:$0xf]
    %v344 = vld [vmem:[#allocation5 + $0x2c8] sm:$0xf]
    %v345 = vld [vmem:[#allocation5 + $0x2cc] sm:$0xf]
    %v346 = vld [vmem:[#allocation5 + $0x2d0] sm:$0xf]
    %v347 = vld [vmem:[#allocation5 + $0x2d4] sm:$0xf]
    %v348 = vld [vmem:[#allocation5 + $0x2d8] sm:$0xf]
    %v349 = vld [vmem:[#allocation5 + $0x2dc] sm:$0xf]
    %v350 = vld [vmem:[#allocation5 + $0x2e0] sm:$0xf]
    %v351 = vld [vmem:[#allocation5 + $0x2e4] sm:$0xf]
    %v352 = vld [vmem:[#allocation5 + $0x2e8] sm:$0xf]
    %v353 = vld [vmem:[#allocation5 + $0x2ec] sm:$0xf]
    %v354 = vld [vmem:[#allocation5 + $0x2f0] sm:$0xf]
    %v355 = vld [vmem:[#allocation5 + $0x2f4] sm:$0xf]
    %v356 = vld [vmem:[#allocation5 + $0x2f8] sm:$0xf]
    %v357 = vld [vmem:[#allocation5 + $0x2fc] sm:$0xf]
    %v358 = vld [vmem:[#allocation5 + $0x300] sm:$0xf]
    %v359 = vld [vmem:[#allocation5 + $0x304] sm:$0xf]
    %v360 = vld [vmem:[#allocation5 + $0x308] sm:$0xf]
    %v361 = vld [vmem:[#allocation5 + $0x30c] sm:$0xf]
    %v362 = vld [vmem:[#allocation5 + $0x310] sm:$0xf]
    %v363 = vld [vmem:[#allocation5 + $0x314] sm:$0xf]
    %v364 = vld [vmem:[#allocation5 + $0x318] sm:$0xf]
    %v365 = vld [vmem:[#allocation5 + $0x31c] sm:$0xf]
    %v366 = vld [vmem:[#allocation5 + $0x320] sm:$0xf]
    %v367 = vld [vmem:[#allocation5 + $0x324] sm:$0xf]
    %v368 = vld [vmem:[#allocation5 + $0x328] sm:$0xf]
    %v369 = vld [vmem:[#allocation5 + $0x32c] sm:$0xf]
    %v370 = vld [vmem:[#allocation5 + $0x330] sm:$0xf]
    %v371 = vld [vmem:[#allocation5 + $0x334] sm:$0xf]
    %v372 = vld [vmem:[#allocation5 + $0x338] sm:$0xf]
    %v373 = vld [vmem:[#allocation5 + $0x33c] sm:$0xf]
    %v374 = vld [vmem:[#allocation5 + $0x340] sm:$0xf]
    %v375 = vld [vmem:[#allocation5 + $0x344] sm:$0xf]
    %v376 = vld [vmem:[#allocation5 + $0x348] sm:$0xf]
    %v377 = vld [vmem:[#allocation5 + $0x34c] sm:$0xf]
    %v378 = vld [vmem:[#allocation5 + $0x350] sm:$0xf]
    %v379 = vld [vmem:[#allocation5 + $0x354] sm:$0xf]
    %v380 = vld [vmem:[#allocation5 + $0x358] sm:$0xf]
    %v381 = vld [vmem:[#allocation5 + $0x35c] sm:$0xf]
    %v382 = vld [vmem:[#allocation5 + $0x360] sm:$0xf]
    %v383 = vld [vmem:[#allocation5 + $0x364] sm:$0xf]
    %v384 = vld [vmem:[#allocation5 + $0x368] sm:$0xf]
    %v385 = vld [vmem:[#allocation5 + $0x36c] sm:$0xf]
    %v386 = vld [vmem:[#allocation5 + $0x370] sm:$0xf]
    %v387 = vld [vmem:[#allocation5 + $0x374] sm:$0xf]
    %v388 = vld [vmem:[#allocation5 + $0x378] sm:$0xf]
    %v389 = vld [vmem:[#allocation5 + $0x37c] sm:$0xf]
    %v390 = vld [vmem:[#allocation5 + $0x380] sm:$0xf]
    %v391 = vld [vmem:[#allocation5 + $0x384] sm:$0xf]
    %v392 = vld [vmem:[#allocation5 + $0x388] sm:$0xf]
    %v393 = vld [vmem:[#allocation5 + $0x38c] sm:$0xf]
    %v394 = vld [vmem:[#allocation5 + $0x390] sm:$0xf]
    %v395 = vld [vmem:[#allocation5 + $0x394] sm:$0xf]
    %v396 = vld [vmem:[#allocation5 + $0x398] sm:$0xf]
    %v397 = vld [vmem:[#allocation5 + $0x39c] sm:$0xf]
    %v398 = vld [vmem:[#allocation5 + $0x3a0] sm:$0xf]
    %v399 = vld [vmem:[#allocation5 + $0x3a4] sm:$0xf]
    %v400 = vld [vmem:[#allocation5 + $0x3a8] sm:$0xf]
    %v401 = vld [vmem:[#allocation5 + $0x3ac] sm:$0xf]
    %v402 = vld [vmem:[#allocation5 + $0x3b0] sm:$0xf]
    %v403 = vld [vmem:[#allocation5 + $0x3b4] sm:$0xf]
    %v404 = vld [vmem:[#allocation5 + $0x3b8] sm:$0xf]
    %v405 = vld [vmem:[#allocation5 + $0x3bc] sm:$0xf]
    %v406 = vld [vmem:[#allocation5 + $0x3c0] sm:$0xf]
    %v407 = vld [vmem:[#allocation5 + $0x3c4] sm:$0xf]
    %v408 = vld [vmem:[#allocation5 + $0x3c8] sm:$0xf]
    %v409 = vld [vmem:[#allocation5 + $0x3cc] sm:$0xf]
    %v410 = vld [vmem:[#allocation5 + $0x3d0] sm:$0xf]
    %v411 = vld [vmem:[#allocation5 + $0x3d4] sm:$0xf]
    %v412 = vld [vmem:[#allocation5 + $0x3d8] sm:$0xf]
    %v413 = vld [vmem:[#allocation5 + $0x3dc] sm:$0xf]
    %v414 = vld [vmem:[#allocation5 + $0x3e0] sm:$0xf]
    %v415 = vld [vmem:[#allocation5 + $0x3e4] sm:$0xf]
    %v416 = vld [vmem:[#allocation5 + $0x3e8] sm:$0xf]
    %v417 = vld [vmem:[#allocation5 + $0x3ec] sm:$0xf]
    %v418 = vld [vmem:[#allocation5 + $0x3f0] sm:$0xf]
    %v419 = vld [vmem:[#allocation5 + $0x3f4] sm:$0xf]
    %v420 = vld [vmem:[#allocation5 + $0x3f8] sm:$0xf]
    %v421 = vld [vmem:[#allocation5 + $0x3fc] sm:$0xf]
    %v422 = vld [vmem:[%s2] sm:$0x1]
    %v424 = vlaneseq
    %v425 = vshrl.u32 %v424, 7
    %v426 = vsub.s32 0, %v425
    %v427 = vrot.slane %v422, %v426
    %v685 = vunpack.c.l.b16 %v166
    %v686 = vunpack.c.l.b16 %v167
    %v687 = vunpack.c.l.b16 %v168
    %v688 = vunpack.c.l.b16 %v169
    %v689 = vunpack.c.l.b16 %v170
    %v690 = vunpack.c.l.b16 %v171
    %v691 = vunpack.c.l.b16 %v172
    %v692 = vunpack.c.l.b16 %v173
    %v693 = vunpack.c.l.b16 %v174
    %v694 = vunpack.c.l.b16 %v175
    %v695 = vunpack.c.l.b16 %v176
    %v696 = vunpack.c.l.b16 %v177
    %v697 = vunpack.c.l.b16 %v178
    %v698 = vunpack.c.l.b16 %v179
    %v699 = vunpack.c.l.b16 %v180
    %v700 = vunpack.c.l.b16 %v181
    %v701 = vunpack.c.l.b16 %v182
    %v702 = vunpack.c.l.b16 %v183
    %v703 = vunpack.c.l.b16 %v184
    %v704 = vunpack.c.l.b16 %v185
    %v705 = vunpack.c.l.b16 %v186
    %v706 = vunpack.c.l.b16 %v187
    %v707 = vunpack.c.l.b16 %v188
    %v708 = vunpack.c.l.b16 %v189
    %v709 = vunpack.c.l.b16 %v190
    %v710 = vunpack.c.l.b16 %v191
    %v711 = vunpack.c.l.b16 %v192
    %v712 = vunpack.c.l.b16 %v193
    %v713 = vunpack.c.l.b16 %v194
    %v714 = vunpack.c.l.b16 %v195
    %v715 = vunpack.c.l.b16 %v196
    %v716 = vunpack.c.l.b16 %v197
    %v717 = vunpack.c.l.b16 %v198
    %v718 = vunpack.c.l.b16 %v199
    %v719 = vunpack.c.l.b16 %v200
    %v720 = vunpack.c.l.b16 %v201
    %v721 = vunpack.c.l.b16 %v202
    %v722 = vunpack.c.l.b16 %v203
    %v723 = vunpack.c.l.b16 %v204
    %v724 = vunpack.c.l.b16 %v205
    %v725 = vunpack.c.l.b16 %v206
    %v726 = vunpack.c.l.b16 %v207
    %v727 = vunpack.c.l.b16 %v208
    %v728 = vunpack.c.l.b16 %v209
    %v729 = vunpack.c.l.b16 %v210
    %v730 = vunpack.c.l.b16 %v211
    %v731 = vunpack.c.l.b16 %v212
    %v732 = vunpack.c.l.b16 %v213
    %v733 = vunpack.c.l.b16 %v214
    %v734 = vunpack.c.l.b16 %v215
    %v735 = vunpack.c.l.b16 %v216
    %v736 = vunpack.c.l.b16 %v217
    %v737 = vunpack.c.l.b16 %v218
    %v738 = vunpack.c.l.b16 %v219
    %v739 = vunpack.c.l.b16 %v220
    %v740 = vunpack.c.l.b16 %v221
    %v741 = vunpack.c.l.b16 %v222
    %v742 = vunpack.c.l.b16 %v223
    %v743 = vunpack.c.l.b16 %v224
    %v744 = vunpack.c.l.b16 %v225
    %v745 = vunpack.c.l.b16 %v226
    %v746 = vunpack.c.l.b16 %v227
    %v747 = vunpack.c.l.b16 %v228
    %v748 = vunpack.c.l.b16 %v229
    %v749 = vunpack.c.l.b16 %v230
    %v750 = vunpack.c.l.b16 %v231
    %v751 = vunpack.c.l.b16 %v232
    %v752 = vunpack.c.l.b16 %v233
    %v753 = vunpack.c.l.b16 %v234
    %v754 = vunpack.c.l.b16 %v235
    %v755 = vunpack.c.l.b16 %v236
    %v756 = vunpack.c.l.b16 %v237
    %v757 = vunpack.c.l.b16 %v238
    %v758 = vunpack.c.l.b16 %v239
    %v759 = vunpack.c.l.b16 %v240
    %v760 = vunpack.c.l.b16 %v241
    %v761 = vunpack.c.l.b16 %v242
    %v762 = vunpack.c.l.b16 %v243
    %v763 = vunpack.c.l.b16 %v244
    %v764 = vunpack.c.l.b16 %v245
    %v765 = vunpack.c.l.b16 %v246
    %v766 = vunpack.c.l.b16 %v247
    %v767 = vunpack.c.l.b16 %v248
    %v768 = vunpack.c.l.b16 %v249
    %v769 = vunpack.c.l.b16 %v250
    %v770 = vunpack.c.l.b16 %v251
    %v771 = vunpack.c.l.b16 %v252
    %v772 = vunpack.c.l.b16 %v253
    %v773 = vunpack.c.l.b16 %v254
    %v774 = vunpack.c.l.b16 %v255
    %v775 = vunpack.c.l.b16 %v256
    %v776 = vunpack.c.l.b16 %v257
    %v777 = vunpack.c.l.b16 %v258
    %v778 = vunpack.c.l.b16 %v259
    %v779 = vunpack.c.l.b16 %v260
    %v780 = vunpack.c.l.b16 %v261
    %v781 = vunpack.c.l.b16 %v262
    %v782 = vunpack.c.l.b16 %v263
    %v783 = vunpack.c.l.b16 %v264
    %v784 = vunpack.c.l.b16 %v265
    %v785 = vunpack.c.l.b16 %v266
    %v786 = vunpack.c.l.b16 %v267
    %v787 = vunpack.c.l.b16 %v268
    %v788 = vunpack.c.l.b16 %v269
    %v789 = vunpack.c.l.b16 %v270
    %v790 = vunpack.c.l.b16 %v271
    %v791 = vunpack.c.l.b16 %v272
    %v792 = vunpack.c.l.b16 %v273
    %v793 = vunpack.c.l.b16 %v274
    %v794 = vunpack.c.l.b16 %v275
    %v795 = vunpack.c.l.b16 %v276
    %v796 = vunpack.c.l.b16 %v277
    %v797 = vunpack.c.l.b16 %v278
    %v798 = vunpack.c.l.b16 %v279
    %v799 = vunpack.c.l.b16 %v280
    %v800 = vunpack.c.l.b16 %v281
    %v801 = vunpack.c.l.b16 %v282
    %v802 = vunpack.c.l.b16 %v283
    %v803 = vunpack.c.l.b16 %v284
    %v804 = vunpack.c.l.b16 %v285
    %v805 = vunpack.c.l.b16 %v286
    %v806 = vunpack.c.l.b16 %v287
    %v807 = vunpack.c.l.b16 %v288
    %v808 = vunpack.c.l.b16 %v289
    %v809 = vunpack.c.l.b16 %v290
    %v810 = vunpack.c.l.b16 %v291
    %v811 = vunpack.c.l.b16 %v292
    %v812 = vunpack.c.l.b16 %v293
    %v813 = vunpack.c.l.b16 %v294
    %v814 = vunpack.c.l.b16 %v295
    %v815 = vunpack.c.l.b16 %v296
    %v816 = vunpack.c.l.b16 %v297
    %v817 = vunpack.c.l.b16 %v298
    %v818 = vunpack.c.l.b16 %v299
    %v819 = vunpack.c.l.b16 %v300
    %v820 = vunpack.c.l.b16 %v301
    %v821 = vunpack.c.l.b16 %v302
    %v822 = vunpack.c.l.b16 %v303
    %v823 = vunpack.c.l.b16 %v304
    %v824 = vunpack.c.l.b16 %v305
    %v825 = vunpack.c.l.b16 %v306
    %v826 = vunpack.c.l.b16 %v307
    %v827 = vunpack.c.l.b16 %v308
    %v828 = vunpack.c.l.b16 %v309
    %v829 = vunpack.c.l.b16 %v310
    %v830 = vunpack.c.l.b16 %v311
    %v831 = vunpack.c.l.b16 %v312
    %v832 = vunpack.c.l.b16 %v313
    %v833 = vunpack.c.l.b16 %v314
    %v834 = vunpack.c.l.b16 %v315
    %v835 = vunpack.c.l.b16 %v316
    %v836 = vunpack.c.l.b16 %v317
    %v837 = vunpack.c.l.b16 %v318
    %v838 = vunpack.c.l.b16 %v319
    %v839 = vunpack.c.l.b16 %v320
    %v840 = vunpack.c.l.b16 %v321
    %v841 = vunpack.c.l.b16 %v322
    %v842 = vunpack.c.l.b16 %v323
    %v843 = vunpack.c.l.b16 %v324
    %v844 = vunpack.c.l.b16 %v325
    %v845 = vunpack.c.l.b16 %v326
    %v846 = vunpack.c.l.b16 %v327
    %v847 = vunpack.c.l.b16 %v328
    %v848 = vunpack.c.l.b16 %v329
    %v849 = vunpack.c.l.b16 %v330
    %v850 = vunpack.c.l.b16 %v331
    %v851 = vunpack.c.l.b16 %v332
    %v852 = vunpack.c.l.b16 %v333
    %v853 = vunpack.c.l.b16 %v334
    %v854 = vunpack.c.l.b16 %v335
    %v855 = vunpack.c.l.b16 %v336
    %v856 = vunpack.c.l.b16 %v337
    %v857 = vunpack.c.l.b16 %v338
    %v858 = vunpack.c.l.b16 %v339
    %v859 = vunpack.c.l.b16 %v340
    %v860 = vunpack.c.l.b16 %v341
    %v861 = vunpack.c.l.b16 %v342
    %v862 = vunpack.c.l.b16 %v343
    %v863 = vunpack.c.l.b16 %v344
    %v864 = vunpack.c.l.b16 %v345
    %v865 = vunpack.c.l.b16 %v346
    %v866 = vunpack.c.l.b16 %v347
    %v867 = vunpack.c.l.b16 %v348
    %v868 = vunpack.c.l.b16 %v349
    %v869 = vunpack.c.l.b16 %v350
    %v870 = vunpack.c.l.b16 %v351
    %v871 = vunpack.c.l.b16 %v352
    %v872 = vunpack.c.l.b16 %v353
    %v873 = vunpack.c.l.b16 %v354
    %v874 = vunpack.c.l.b16 %v355
    %v875 = vunpack.c.l.b16 %v356
    %v876 = vunpack.c.l.b16 %v357
    %v877 = vunpack.c.l.b16 %v358
    %v878 = vunpack.c.l.b16 %v359
    %v879 = vunpack.c.l.b16 %v360
    %v880 = vunpack.c.l.b16 %v361
    %v881 = vunpack.c.l.b16 %v362
    %v882 = vunpack.c.l.b16 %v363
    %v883 = vunpack.c.l.b16 %v364
    %v884 = vunpack.c.l.b16 %v365
    %v885 = vunpack.c.l.b16 %v366
    %v886 = vunpack.c.l.b16 %v367
    %v887 = vunpack.c.l.b16 %v368
    %v888 = vunpack.c.l.b16 %v369
    %v889 = vunpack.c.l.b16 %v370
    %v890 = vunpack.c.l.b16 %v371
    %v891 = vunpack.c.l.b16 %v372
    %v892 = vunpack.c.l.b16 %v373
    %v893 = vunpack.c.l.b16 %v374
    %v894 = vunpack.c.l.b16 %v375
    %v895 = vunpack.c.l.b16 %v376
    %v896 = vunpack.c.l.b16 %v377
    %v897 = vunpack.c.l.b16 %v378
    %v898 = vunpack.c.l.b16 %v379
    %v899 = vunpack.c.l.b16 %v380
    %v900 = vunpack.c.l.b16 %v381
    %v901 = vunpack.c.l.b16 %v382
    %v902 = vunpack.c.l.b16 %v383
    %v903 = vunpack.c.l.b16 %v384
    %v904 = vunpack.c.l.b16 %v385
    %v905 = vunpack.c.l.b16 %v386
    %v906 = vunpack.c.l.b16 %v387
    %v907 = vunpack.c.l.b16 %v388
    %v908 = vunpack.c.l.b16 %v389
    %v909 = vunpack.c.l.b16 %v390
    %v910 = vunpack.c.l.b16 %v391
    %v911 = vunpack.c.l.b16 %v392
    %v912 = vunpack.c.l.b16 %v393
    %v913 = vunpack.c.l.b16 %v394
    %v914 = vunpack.c.l.b16 %v395
    %v915 = vunpack.c.l.b16 %v396
    %v916 = vunpack.c.l.b16 %v397
    %v917 = vunpack.c.l.b16 %v398
    %v918 = vunpack.c.l.b16 %v399
    %v919 = vunpack.c.l.b16 %v400
    %v920 = vunpack.c.l.b16 %v401
    %v921 = vunpack.c.l.b16 %v402
    %v922 = vunpack.c.l.b16 %v403
    %v923 = vunpack.c.l.b16 %v404
    %v924 = vunpack.c.l.b16 %v405
    %v925 = vunpack.c.l.b16 %v406
    %v926 = vunpack.c.l.b16 %v407
    %v927 = vunpack.c.l.b16 %v408
    %v928 = vunpack.c.l.b16 %v409
    %v929 = vunpack.c.l.b16 %v410
    %v930 = vunpack.c.l.b16 %v411
    %v931 = vunpack.c.l.b16 %v412
    %v932 = vunpack.c.l.b16 %v413
    %v933 = vunpack.c.l.b16 %v414
    %v934 = vunpack.c.l.b16 %v415
    %v935 = vunpack.c.l.b16 %v416
    %v936 = vunpack.c.l.b16 %v417
    %v937 = vunpack.c.l.b16 %v418
    %v938 = vunpack.c.l.b16 %v419
    %v939 = vunpack.c.l.b16 %v420
    %v940 = vunpack.c.l.b16 %v421
    %v941 = vpack.c.b16 %v686, %v685
    %v942 = vpack.c.b16 %v688, %v687
    %v943 = vpack.c.b16 %v690, %v689
    %v944 = vpack.c.b16 %v692, %v691
    %v945 = vpack.c.b16 %v694, %v693
    %v946 = vpack.c.b16 %v696, %v695
    %v947 = vpack.c.b16 %v698, %v697
    %v948 = vpack.c.b16 %v700, %v699
    %v949 = vpack.c.b16 %v702, %v701
    %v950 = vpack.c.b16 %v704, %v703
    %v951 = vpack.c.b16 %v706, %v705
    %v952 = vpack.c.b16 %v708, %v707
    %v953 = vpack.c.b16 %v710, %v709
    %v954 = vpack.c.b16 %v712, %v711
    %v955 = vpack.c.b16 %v714, %v713
    %v956 = vpack.c.b16 %v716, %v715
    %v957 = vpack.c.b16 %v718, %v717
    %v958 = vpack.c.b16 %v720, %v719
    %v959 = vpack.c.b16 %v722, %v721
    %v960 = vpack.c.b16 %v724, %v723
    %v961 = vpack.c.b16 %v726, %v725
    %v962 = vpack.c.b16 %v728, %v727
    %v963 = vpack.c.b16 %v730, %v729
    %v964 = vpack.c.b16 %v732, %v731
    %v965 = vpack.c.b16 %v734, %v733
    %v966 = vpack.c.b16 %v736, %v735
    %v967 = vpack.c.b16 %v738, %v737
    %v968 = vpack.c.b16 %v740, %v739
    %v969 = vpack.c.b16 %v742, %v741
    %v970 = vpack.c.b16 %v744, %v743
    %v971 = vpack.c.b16 %v746, %v745
    %v972 = vpack.c.b16 %v748, %v747
    %v973 = vpack.c.b16 %v750, %v749
    %v974 = vpack.c.b16 %v752, %v751
    %v975 = vpack.c.b16 %v754, %v753
    %v976 = vpack.c.b16 %v756, %v755
    %v977 = vpack.c.b16 %v758, %v757
    %v978 = vpack.c.b16 %v760, %v759
    %v979 = vpack.c.b16 %v762, %v761
    %v980 = vpack.c.b16 %v764, %v763
    %v981 = vpack.c.b16 %v766, %v765
    %v982 = vpack.c.b16 %v768, %v767
    %v983 = vpack.c.b16 %v770, %v769
    %v984 = vpack.c.b16 %v772, %v771
    %v985 = vpack.c.b16 %v774, %v773
    %v986 = vpack.c.b16 %v776, %v775
    %v987 = vpack.c.b16 %v778, %v777
    %v988 = vpack.c.b16 %v780, %v779
    %v989 = vpack.c.b16 %v782, %v781
    %v990 = vpack.c.b16 %v784, %v783
    %v991 = vpack.c.b16 %v786, %v785
    %v992 = vpack.c.b16 %v788, %v787
    %v993 = vpack.c.b16 %v790, %v789
    %v994 = vpack.c.b16 %v792, %v791
    %v995 = vpack.c.b16 %v794, %v793
    %v996 = vpack.c.b16 %v796, %v795
    %v997 = vpack.c.b16 %v798, %v797
    %v998 = vpack.c.b16 %v800, %v799
    %v999 = vpack.c.b16 %v802, %v801
    %v1000 = vpack.c.b16 %v804, %v803
    %v1001 = vpack.c.b16 %v806, %v805
    %v1002 = vpack.c.b16 %v808, %v807
    %v1003 = vpack.c.b16 %v810, %v809
    %v1004 = vpack.c.b16 %v812, %v811
    %v1005 = vpack.c.b16 %v814, %v813
    %v1006 = vpack.c.b16 %v816, %v815
    %v1007 = vpack.c.b16 %v818, %v817
    %v1008 = vpack.c.b16 %v820, %v819
    %v1009 = vpack.c.b16 %v822, %v821
    %v1010 = vpack.c.b16 %v824, %v823
    %v1011 = vpack.c.b16 %v826, %v825
    %v1012 = vpack.c.b16 %v828, %v827
    %v1013 = vpack.c.b16 %v830, %v829
    %v1014 = vpack.c.b16 %v832, %v831
    %v1015 = vpack.c.b16 %v834, %v833
    %v1016 = vpack.c.b16 %v836, %v835
    %v1017 = vpack.c.b16 %v838, %v837
    %v1018 = vpack.c.b16 %v840, %v839
    %v1019 = vpack.c.b16 %v842, %v841
    %v1020 = vpack.c.b16 %v844, %v843
    %v1021 = vpack.c.b16 %v846, %v845
    %v1022 = vpack.c.b16 %v848, %v847
    %v1023 = vpack.c.b16 %v850, %v849
    %v1024 = vpack.c.b16 %v852, %v851
    %v1025 = vpack.c.b16 %v854, %v853
    %v1026 = vpack.c.b16 %v856, %v855
    %v1027 = vpack.c.b16 %v858, %v857
    %v1028 = vpack.c.b16 %v860, %v859
    %v1029 = vpack.c.b16 %v862, %v861
    %v1030 = vpack.c.b16 %v864, %v863
    %v1031 = vpack.c.b16 %v866, %v865
    %v1032 = vpack.c.b16 %v868, %v867
    %v1033 = vpack.c.b16 %v870, %v869
    %v1034 = vpack.c.b16 %v872, %v871
    %v1035 = vpack.c.b16 %v874, %v873
    %v1036 = vpack.c.b16 %v876, %v875
    %v1037 = vpack.c.b16 %v878, %v877
    %v1038 = vpack.c.b16 %v880, %v879
    %v1039 = vpack.c.b16 %v882, %v881
    %v1040 = vpack.c.b16 %v884, %v883
    %v1041 = vpack.c.b16 %v886, %v885
    %v1042 = vpack.c.b16 %v888, %v887
    %v1043 = vpack.c.b16 %v890, %v889
    %v1044 = vpack.c.b16 %v892, %v891
    %v1045 = vpack.c.b16 %v894, %v893
    %v1046 = vpack.c.b16 %v896, %v895
    %v1047 = vpack.c.b16 %v898, %v897
    %v1048 = vpack.c.b16 %v900, %v899
    %v1049 = vpack.c.b16 %v902, %v901
    %v1050 = vpack.c.b16 %v904, %v903
    %v1051 = vpack.c.b16 %v906, %v905
    %v1052 = vpack.c.b16 %v908, %v907
    %v1053 = vpack.c.b16 %v910, %v909
    %v1054 = vpack.c.b16 %v912, %v911
    %v1055 = vpack.c.b16 %v914, %v913
    %v1056 = vpack.c.b16 %v916, %v915
    %v1057 = vpack.c.b16 %v918, %v917
    %v1058 = vpack.c.b16 %v920, %v919
    %v1059 = vpack.c.b16 %v922, %v921
    %v1060 = vpack.c.b16 %v924, %v923
    %v1061 = vpack.c.b16 %v926, %v925
    %v1062 = vpack.c.b16 %v928, %v927
    %v1063 = vpack.c.b16 %v930, %v929
    %v1064 = vpack.c.b16 %v932, %v931
    %v1065 = vpack.c.b16 %v934, %v933
    %v1066 = vpack.c.b16 %v936, %v935
    %v1067 = vpack.c.b16 %v938, %v937
    %v1068 = vpack.c.b16 %v940, %v939
    %1197 = vmatprep.subr.bf16.mxu0 0
    %1198 = vmatpush1.bf16.msra.mxu0 %v948
    %1199 = vmatprep.subr.bf16.mxu0 0
    %1200 = vmatpush1.bf16.msra.mxu0 %v947
    %1201 = vmatprep.subr.bf16.mxu0 0
    %1202 = vmatpush1.bf16.msra.mxu0 %v946
    %1203 = vmatprep.subr.bf16.mxu0 0
    %1204 = vmatpush1.bf16.msra.mxu0 %v945
    %1205 = vmatprep.subr.bf16.mxu0 0
    %1206 = vmatpush1.bf16.msra.mxu0 %v944
    %1207 = vmatprep.subr.bf16.mxu0 0
    %1208 = vmatpush1.bf16.msra.mxu0 %v943
    %1209 = vmatprep.subr.bf16.mxu0 0
    %1210 = vmatpush1.bf16.msra.mxu0 %v942
    %1211 = vmatprep.subr.bf16.mxu0 0
    %1212 = vmatpush1.bf16.msra.mxu0 %v941
    %1213 = vmatprep.subr.bf16.mxu0 0
    %1214 = vmatpush2.bf16.msra.mxu0 %v956
    %1215 = vmatprep.subr.bf16.mxu0 0
    %1216 = vmatpush2.bf16.msra.mxu0 %v955
    %1217 = vmatprep.subr.bf16.mxu0 0
    %1218 = vmatpush2.bf16.msra.mxu0 %v954
    %1219 = vmatprep.subr.bf16.mxu0 0
    %1220 = vmatpush2.bf16.msra.mxu0 %v953
    %1221 = vmatprep.subr.bf16.mxu0 0
    %1222 = vmatpush2.bf16.msra.mxu0 %v952
    %1223 = vmatprep.subr.bf16.mxu0 0
    %1224 = vmatpush2.bf16.msra.mxu0 %v951
    %1225 = vmatprep.subr.bf16.mxu0 0
    %1226 = vmatpush2.bf16.msra.mxu0 %v950
    %1227 = vmatprep.subr.bf16.mxu0 0
    %1228 = vmatpush2.bf16.msra.mxu0 %v949
    %1229 = vmatprep.mubr.bf16.mxu0 %v151
    %1230 = vmatmul.mubr.bf16.gmra.mxu0 %v150
    %v1231 = vpop.f32.mrf.mxu0
    %v1232 = vadd.f32 %v427, %v1231
    %v1233 = vpop.f32.mrf.mxu0
    %v1234 = vpop.f32.mrf.mxu0
    %v1235 = vpop.f32.mrf.mxu0
    %1236 = vdwg.mxu0
    %1237 = vmatprep.subr.bf16.mxu0 0
    %1238 = vmatpush1.bf16.msra.mxu0 %v964
    %1239 = vmatprep.subr.bf16.mxu0 0
    %1240 = vmatpush1.bf16.msra.mxu0 %v963
    %1241 = vmatprep.subr.bf16.mxu0 0
    %1242 = vmatpush1.bf16.msra.mxu0 %v962
    %1243 = vmatprep.subr.bf16.mxu0 0
    %1244 = vmatpush1.bf16.msra.mxu0 %v961
    %1245 = vmatprep.subr.bf16.mxu0 0
    %1246 = vmatpush1.bf16.msra.mxu0 %v960
    %1247 = vmatprep.subr.bf16.mxu0 0
    %1248 = vmatpush1.bf16.msra.mxu0 %v959
    %1249 = vmatprep.subr.bf16.mxu0 0
    %1250 = vmatpush1.bf16.msra.mxu0 %v958
    %1251 = vmatprep.subr.bf16.mxu0 0
    %1252 = vmatpush1.bf16.msra.mxu0 %v957
    %1253 = vmatprep.subr.bf16.mxu0 0
    %1254 = vmatpush2.bf16.msra.mxu0 %v972
    %1255 = vmatprep.subr.bf16.mxu0 0
    %1256 = vmatpush2.bf16.msra.mxu0 %v971
    %1257 = vmatprep.subr.bf16.mxu0 0
    %1258 = vmatpush2.bf16.msra.mxu0 %v970
    %1259 = vmatprep.subr.bf16.mxu0 0
    %1260 = vmatpush2.bf16.msra.mxu0 %v969
    %1261 = vmatprep.subr.bf16.mxu0 0
    %1262 = vmatpush2.bf16.msra.mxu0 %v968
    %1263 = vmatprep.subr.bf16.mxu0 0
    %1264 = vmatpush2.bf16.msra.mxu0 %v967
    %1265 = vmatprep.subr.bf16.mxu0 0
    %1266 = vmatpush2.bf16.msra.mxu0 %v966
    %1267 = vmatprep.subr.bf16.mxu0 0
    %1268 = vmatpush2.bf16.msra.mxu0 %v965
    %1269 = vmatprep.mubr.bf16.mxu0 %v153
    %1270 = vmatmul.mubr.bf16.gmra.mxu0 %v152
    %v1271 = vpop.f32.mrf.mxu0
    %v1272 = vadd.f32 %v1232, %v1271
    %v1273 = vpop.f32.mrf.mxu0
    %v1274 = vpop.f32.mrf.mxu0
    %v1275 = vpop.f32.mrf.mxu0
    %1276 = vdwg.mxu0
    %1277 = vmatprep.subr.bf16.mxu0 0
    %1278 = vmatpush1.bf16.msra.mxu0 %v980
    %1279 = vmatprep.subr.bf16.mxu0 0
    %1280 = vmatpush1.bf16.msra.mxu0 %v979
    %1281 = vmatprep.subr.bf16.mxu0 0
    %1282 = vmatpush1.bf16.msra.mxu0 %v978
    %1283 = vmatprep.subr.bf16.mxu0 0
    %1284 = vmatpush1.bf16.msra.mxu0 %v977
    %1285 = vmatprep.subr.bf16.mxu0 0
    %1286 = vmatpush1.bf16.msra.mxu0 %v976
    %1287 = vmatprep.subr.bf16.mxu0 0
    %1288 = vmatpush1.bf16.msra.mxu0 %v975
    %1289 = vmatprep.subr.bf16.mxu0 0
    %1290 = vmatpush1.bf16.msra.mxu0 %v974
    %1291 = vmatprep.subr.bf16.mxu0 0
    %1292 = vmatpush1.bf16.msra.mxu0 %v973
    %1293 = vmatprep.subr.bf16.mxu0 0
    %1294 = vmatpush2.bf16.msra.mxu0 %v988
    %1295 = vmatprep.subr.bf16.mxu0 0
    %1296 = vmatpush2.bf16.msra.mxu0 %v987
    %1297 = vmatprep.subr.bf16.mxu0 0
    %1298 = vmatpush2.bf16.msra.mxu0 %v986
    %1299 = vmatprep.subr.bf16.mxu0 0
    %1300 = vmatpush2.bf16.msra.mxu0 %v985
    %1301 = vmatprep.subr.bf16.mxu0 0
    %1302 = vmatpush2.bf16.msra.mxu0 %v984
    %1303 = vmatprep.subr.bf16.mxu0 0
    %1304 = vmatpush2.bf16.msra.mxu0 %v983
    %1305 = vmatprep.subr.bf16.mxu0 0
    %1306 = vmatpush2.bf16.msra.mxu0 %v982
    %1307 = vmatprep.subr.bf16.mxu0 0
    %1308 = vmatpush2.bf16.msra.mxu0 %v981
    %1309 = vmatprep.mubr.bf16.mxu0 %v155
    %1310 = vmatmul.mubr.bf16.gmra.mxu0 %v154
    %v1311 = vpop.f32.mrf.mxu0
    %v1312 = vadd.f32 %v1272, %v1311
    %v1313 = vpop.f32.mrf.mxu0
    %v1314 = vpop.f32.mrf.mxu0
    %v1315 = vpop.f32.mrf.mxu0
    %1316 = vdwg.mxu0
    %1317 = vmatprep.subr.bf16.mxu0 0
    %1318 = vmatpush1.bf16.msra.mxu0 %v996
    %1319 = vmatprep.subr.bf16.mxu0 0
    %1320 = vmatpush1.bf16.msra.mxu0 %v995
    %1321 = vmatprep.subr.bf16.mxu0 0
    %1322 = vmatpush1.bf16.msra.mxu0 %v994
    %1323 = vmatprep.subr.bf16.mxu0 0
    %1324 = vmatpush1.bf16.msra.mxu0 %v993
    %1325 = vmatprep.subr.bf16.mxu0 0
    %1326 = vmatpush1.bf16.msra.mxu0 %v992
    %1327 = vmatprep.subr.bf16.mxu0 0
    %1328 = vmatpush1.bf16.msra.mxu0 %v991
    %1329 = vmatprep.subr.bf16.mxu0 0
    %1330 = vmatpush1.bf16.msra.mxu0 %v990
    %1331 = vmatprep.subr.bf16.mxu0 0
    %1332 = vmatpush1.bf16.msra.mxu0 %v989
    %1333 = vmatprep.subr.bf16.mxu0 0
    %1334 = vmatpush2.bf16.msra.mxu0 %v1004
    %1335 = vmatprep.subr.bf16.mxu0 0
    %1336 = vmatpush2.bf16.msra.mxu0 %v1003
    %1337 = vmatprep.subr.bf16.mxu0 0
    %1338 = vmatpush2.bf16.msra.mxu0 %v1002
    %1339 = vmatprep.subr.bf16.mxu0 0
    %1340 = vmatpush2.bf16.msra.mxu0 %v1001
    %1341 = vmatprep.subr.bf16.mxu0 0
    %1342 = vmatpush2.bf16.msra.mxu0 %v1000
    %1343 = vmatprep.subr.bf16.mxu0 0
    %1344 = vmatpush2.bf16.msra.mxu0 %v999
    %1345 = vmatprep.subr.bf16.mxu0 0
    %1346 = vmatpush2.bf16.msra.mxu0 %v998
    %1347 = vmatprep.subr.bf16.mxu0 0
    %1348 = vmatpush2.bf16.msra.mxu0 %v997
    %1349 = vmatprep.mubr.bf16.mxu0 %v157
    %1350 = vmatmul.mubr.bf16.gmra.mxu0 %v156
    %v1351 = vpop.f32.mrf.mxu0
    %v1352 = vadd.f32 %v1312, %v1351
    %v1353 = vpop.f32.mrf.mxu0
    %v1354 = vpop.f32.mrf.mxu0
    %v1355 = vpop.f32.mrf.mxu0
    %1356 = vdwg.mxu0
    %1357 = vmatprep.subr.bf16.mxu0 0
    %1358 = vmatpush1.bf16.msra.mxu0 %v1012
    %1359 = vmatprep.subr.bf16.mxu0 0
    %1360 = vmatpush1.bf16.msra.mxu0 %v1011
    %1361 = vmatprep.subr.bf16.mxu0 0
    %1362 = vmatpush1.bf16.msra.mxu0 %v1010
    %1363 = vmatprep.subr.bf16.mxu0 0
    %1364 = vmatpush1.bf16.msra.mxu0 %v1009
    %1365 = vmatprep.subr.bf16.mxu0 0
    %1366 = vmatpush1.bf16.msra.mxu0 %v1008
    %1367 = vmatprep.subr.bf16.mxu0 0
    %1368 = vmatpush1.bf16.msra.mxu0 %v1007
    %1369 = vmatprep.subr.bf16.mxu0 0
    %1370 = vmatpush1.bf16.msra.mxu0 %v1006
    %1371 = vmatprep.subr.bf16.mxu0 0
    %1372 = vmatpush1.bf16.msra.mxu0 %v1005
    %1373 = vmatprep.subr.bf16.mxu0 0
    %1374 = vmatpush2.bf16.msra.mxu0 %v1020
    %1375 = vmatprep.subr.bf16.mxu0 0
    %1376 = vmatpush2.bf16.msra.mxu0 %v1019
    %1377 = vmatprep.subr.bf16.mxu0 0
    %1378 = vmatpush2.bf16.msra.mxu0 %v1018
    %1379 = vmatprep.subr.bf16.mxu0 0
    %1380 = vmatpush2.bf16.msra.mxu0 %v1017
    %1381 = vmatprep.subr.bf16.mxu0 0
    %1382 = vmatpush2.bf16.msra.mxu0 %v1016
    %1383 = vmatprep.subr.bf16.mxu0 0
    %1384 = vmatpush2.bf16.msra.mxu0 %v1015
    %1385 = vmatprep.subr.bf16.mxu0 0
    %1386 = vmatpush2.bf16.msra.mxu0 %v1014
    %1387 = vmatprep.subr.bf16.mxu0 0
    %1388 = vmatpush2.bf16.msra.mxu0 %v1013
    %1389 = vmatprep.mubr.bf16.mxu0 %v159
    %1390 = vmatmul.mubr.bf16.gmra.mxu0 %v158
    %v1391 = vpop.f32.mrf.mxu0
    %v1392 = vadd.f32 %v1352, %v1391
    %v1393 = vpop.f32.mrf.mxu0
    %v1394 = vpop.f32.mrf.mxu0
    %v1395 = vpop.f32.mrf.mxu0
    %1396 = vdwg.mxu0
    %1397 = vmatprep.subr.bf16.mxu0 0
    %1398 = vmatpush1.bf16.msra.mxu0 %v1028
    %1399 = vmatprep.subr.bf16.mxu0 0
    %1400 = vmatpush1.bf16.msra.mxu0 %v1027
    %1401 = vmatprep.subr.bf16.mxu0 0
    %1402 = vmatpush1.bf16.msra.mxu0 %v1026
    %1403 = vmatprep.subr.bf16.mxu0 0
    %1404 = vmatpush1.bf16.msra.mxu0 %v1025
    %1405 = vmatprep.subr.bf16.mxu0 0
    %1406 = vmatpush1.bf16.msra.mxu0 %v1024
    %1407 = vmatprep.subr.bf16.mxu0 0
    %1408 = vmatpush1.bf16.msra.mxu0 %v1023
    %1409 = vmatprep.subr.bf16.mxu0 0
    %1410 = vmatpush1.bf16.msra.mxu0 %v1022
    %1411 = vmatprep.subr.bf16.mxu0 0
    %1412 = vmatpush1.bf16.msra.mxu0 %v1021
    %1413 = vmatprep.subr.bf16.mxu0 0
    %1414 = vmatpush2.bf16.msra.mxu0 %v1036
    %1415 = vmatprep.subr.bf16.mxu0 0
    %1416 = vmatpush2.bf16.msra.mxu0 %v1035
    %1417 = vmatprep.subr.bf16.mxu0 0
    %1418 = vmatpush2.bf16.msra.mxu0 %v1034
    %1419 = vmatprep.subr.bf16.mxu0 0
    %1420 = vmatpush2.bf16.msra.mxu0 %v1033
    %1421 = vmatprep.subr.bf16.mxu0 0
    %1422 = vmatpush2.bf16.msra.mxu0 %v1032
    %1423 = vmatprep.subr.bf16.mxu0 0
    %1424 = vmatpush2.bf16.msra.mxu0 %v1031
    %1425 = vmatprep.subr.bf16.mxu0 0
    %1426 = vmatpush2.bf16.msra.mxu0 %v1030
    %1427 = vmatprep.subr.bf16.mxu0 0
    %1428 = vmatpush2.bf16.msra.mxu0 %v1029
    %1429 = vmatprep.mubr.bf16.mxu0 %v161
    %1430 = vmatmul.mubr.bf16.gmra.mxu0 %v160
    %v1431 = vpop.f32.mrf.mxu0
    %v1432 = vadd.f32 %v1392, %v1431
    %v1433 = vpop.f32.mrf.mxu0
    %v1434 = vpop.f32.mrf.mxu0
    %v1435 = vpop.f32.mrf.mxu0
    %1436 = vdwg.mxu0
    %1437 = vmatprep.subr.bf16.mxu0 0
    %1438 = vmatpush1.bf16.msra.mxu0 %v1044
    %1439 = vmatprep.subr.bf16.mxu0 0
    %1440 = vmatpush1.bf16.msra.mxu0 %v1043
    %1441 = vmatprep.subr.bf16.mxu0 0
    %1442 = vmatpush1.bf16.msra.mxu0 %v1042
    %1443 = vmatprep.subr.bf16.mxu0 0
    %1444 = vmatpush1.bf16.msra.mxu0 %v1041
    %1445 = vmatprep.subr.bf16.mxu0 0
    %1446 = vmatpush1.bf16.msra.mxu0 %v1040
    %1447 = vmatprep.subr.bf16.mxu0 0
    %1448 = vmatpush1.bf16.msra.mxu0 %v1039
    %1449 = vmatprep.subr.bf16.mxu0 0
    %1450 = vmatpush1.bf16.msra.mxu0 %v1038
    %1451 = vmatprep.subr.bf16.mxu0 0
    %1452 = vmatpush1.bf16.msra.mxu0 %v1037
    %1453 = vmatprep.subr.bf16.mxu0 0
    %1454 = vmatpush2.bf16.msra.mxu0 %v1052
    %1455 = vmatprep.subr.bf16.mxu0 0
    %1456 = vmatpush2.bf16.msra.mxu0 %v1051
    %1457 = vmatprep.subr.bf16.mxu0 0
    %1458 = vmatpush2.bf16.msra.mxu0 %v1050
    %1459 = vmatprep.subr.bf16.mxu0 0
    %1460 = vmatpush2.bf16.msra.mxu0 %v1049
    %1461 = vmatprep.subr.bf16.mxu0 0
    %1462 = vmatpush2.bf16.msra.mxu0 %v1048
    %1463 = vmatprep.subr.bf16.mxu0 0
    %1464 = vmatpush2.bf16.msra.mxu0 %v1047
    %1465 = vmatprep.subr.bf16.mxu0 0
    %1466 = vmatpush2.bf16.msra.mxu0 %v1046
    %1467 = vmatprep.subr.bf16.mxu0 0
    %1468 = vmatpush2.bf16.msra.mxu0 %v1045
    %1469 = vmatprep.mubr.bf16.mxu0 %v163
    %1470 = vmatmul.mubr.bf16.gmra.mxu0 %v162
    %v1471 = vpop.f32.mrf.mxu0
    %v1472 = vadd.f32 %v1432, %v1471
    %v1473 = vpop.f32.mrf.mxu0
    %v1474 = vpop.f32.mrf.mxu0
    %v1475 = vpop.f32.mrf.mxu0
    %1476 = vdwg.mxu0
    %1477 = vmatprep.subr.bf16.mxu0 0
    %1478 = vmatpush1.bf16.msra.mxu0 %v1060
    %1479 = vmatprep.subr.bf16.mxu0 0
    %1480 = vmatpush1.bf16.msra.mxu0 %v1059
    %1481 = vmatprep.subr.bf16.mxu0 0
    %1482 = vmatpush1.bf16.msra.mxu0 %v1058
    %1483 = vmatprep.subr.bf16.mxu0 0
    %1484 = vmatpush1.bf16.msra.mxu0 %v1057
    %1485 = vmatprep.subr.bf16.mxu0 0
    %1486 = vmatpush1.bf16.msra.mxu0 %v1056
    %1487 = vmatprep.subr.bf16.mxu0 0
    %1488 = vmatpush1.bf16.msra.mxu0 %v1055
    %1489 = vmatprep.subr.bf16.mxu0 0
    %1490 = vmatpush1.bf16.msra.mxu0 %v1054
    %1491 = vmatprep.subr.bf16.mxu0 0
    %1492 = vmatpush1.bf16.msra.mxu0 %v1053
    %1493 = vmatprep.subr.bf16.mxu0 0
    %1494 = vmatpush2.bf16.msra.mxu0 %v1068
    %1495 = vmatprep.subr.bf16.mxu0 0
    %1496 = vmatpush2.bf16.msra.mxu0 %v1067
    %1497 = vmatprep.subr.bf16.mxu0 0
    %1498 = vmatpush2.bf16.msra.mxu0 %v1066
    %1499 = vmatprep.subr.bf16.mxu0 0
    %1500 = vmatpush2.bf16.msra.mxu0 %v1065
    %1501 = vmatprep.subr.bf16.mxu0 0
    %1502 = vmatpush2.bf16.msra.mxu0 %v1064
    %1503 = vmatprep.subr.bf16.mxu0 0
    %1504 = vmatpush2.bf16.msra.mxu0 %v1063
    %1505 = vmatprep.subr.bf16.mxu0 0
    %1506 = vmatpush2.bf16.msra.mxu0 %v1062
    %1507 = vmatprep.subr.bf16.mxu0 0
    %1508 = vmatpush2.bf16.msra.mxu0 %v1061
    %1509 = vmatprep.mubr.bf16.mxu0 %v165
    %1510 = vmatmul.mubr.bf16.gmra.mxu0 %v164
    %v1511 = vpop.f32.mrf.mxu0
    %v1512 = vadd.f32 %v1472, %v1511
    %v1513 = vpop.f32.mrf.mxu0
    %v1514 = vpop.f32.mrf.mxu0
    %v1515 = vpop.f32.mrf.mxu0
    %1516 = vdwg.mxu0
    %v1517 = vmul.f32 %v1512, %v1512
    %vm1518 = vcmask 1041408
    %v1519 = vsel %vm1518, %v1517, 0.0
    %1520 = vadd.xlane.f32.xlu0 %v1519
    %v1521 = vpop.xlane.xlu0 %1520
    %v1522 = vmax.f32 %v1521, 1e-24
    %v1523 = vrsqrt.pop %v1522
    %v1524 = vmul.f32 %v1512, %v1523
    %v1525 = vpack.c.bf16 %v1524, %v1524
    %v1526 = vld [vmem:[#allocation7] sm:$0xff]
    %v1527 = vld [vmem:[#allocation7 + $0x8] sm:$0xff]
    %v1528 = vld [vmem:[#allocation7 + $0x10] sm:$0xff]
    %v1529 = vld [vmem:[#allocation7 + $0x18] sm:$0xff]
    %v1530 = vld [vmem:[#allocation7 + $0x20] sm:$0xff]
    %v1531 = vld [vmem:[#allocation7 + $0x28] sm:$0xff]
    %v1532 = vld [vmem:[#allocation7 + $0x30] sm:$0xff]
    %v1533 = vld [vmem:[#allocation7 + $0x38] sm:$0xff]
    %v1534 = vld [vmem:[#allocation7 + $0x40] sm:$0xff]
    %v1535 = vld [vmem:[#allocation7 + $0x48] sm:$0xff]
    %v1536 = vld [vmem:[#allocation7 + $0x50] sm:$0xff]
    %v1537 = vld [vmem:[#allocation7 + $0x58] sm:$0xff]
    %v1538 = vld [vmem:[#allocation7 + $0x60] sm:$0xff]
    %v1539 = vld [vmem:[#allocation7 + $0x68] sm:$0xff]
    %v1540 = vld [vmem:[#allocation7 + $0x70] sm:$0xff]
    %v1541 = vld [vmem:[#allocation7 + $0x78] sm:$0xff]
    %v1558 = vunpack.c.l.b16 %v1526
    %v1559 = vunpack.c.h.b16 %v1526
    %v1560 = vunpack.c.l.b16 %v1527
    %v1561 = vunpack.c.h.b16 %v1527
    %v1562 = vunpack.c.l.b16 %v1528
    %v1563 = vunpack.c.h.b16 %v1528
    %v1564 = vunpack.c.l.b16 %v1529
    %v1565 = vunpack.c.h.b16 %v1529
    %v1566 = vunpack.c.l.b16 %v1530
    %v1567 = vunpack.c.h.b16 %v1530
    %v1568 = vunpack.c.l.b16 %v1531
    %v1569 = vunpack.c.h.b16 %v1531
    %v1570 = vunpack.c.l.b16 %v1532
    %v1571 = vunpack.c.h.b16 %v1532
    %v1572 = vunpack.c.l.b16 %v1533
    %v1573 = vunpack.c.h.b16 %v1533
    %v1574 = vunpack.c.l.b16 %v1534
    %v1575 = vunpack.c.h.b16 %v1534
    %v1576 = vunpack.c.l.b16 %v1535
    %v1577 = vunpack.c.h.b16 %v1535
    %v1578 = vunpack.c.l.b16 %v1536
    %v1579 = vunpack.c.h.b16 %v1536
    %v1580 = vunpack.c.l.b16 %v1537
    %v1581 = vunpack.c.h.b16 %v1537
    %v1582 = vunpack.c.l.b16 %v1538
    %v1583 = vunpack.c.h.b16 %v1538
    %v1584 = vunpack.c.l.b16 %v1539
    %v1585 = vunpack.c.h.b16 %v1539
    %v1586 = vunpack.c.l.b16 %v1540
    %v1587 = vunpack.c.h.b16 %v1540
    %v1588 = vunpack.c.l.b16 %v1541
    %v1589 = vunpack.c.h.b16 %v1541
    %v1590 = vpack.c.b16 %v1560, %v1558
    %v1591 = vpack.c.b16 %v1561, %v1559
    %v1592 = vpack.c.b16 %v1564, %v1562
    %v1593 = vpack.c.b16 %v1565, %v1563
    %v1594 = vpack.c.b16 %v1568, %v1566
    %v1595 = vpack.c.b16 %v1569, %v1567
    %v1596 = vpack.c.b16 %v1572, %v1570
    %v1597 = vpack.c.b16 %v1573, %v1571
    %v1598 = vpack.c.b16 %v1576, %v1574
    %v1599 = vpack.c.b16 %v1577, %v1575
    %v1600 = vpack.c.b16 %v1580, %v1578
    %v1601 = vpack.c.b16 %v1581, %v1579
    %v1602 = vpack.c.b16 %v1584, %v1582
    %v1603 = vpack.c.b16 %v1585, %v1583
    %v1604 = vpack.c.b16 %v1588, %v1586
    %v1605 = vpack.c.b16 %v1589, %v1587
    %1622 = vmatprep.subr.bf16.mxu0 %v1605
    %1623 = vmatpush1.bf16.msra.mxu0 %v1604
    %1624 = vmatprep.subr.bf16.mxu0 %v1603
    %1625 = vmatpush1.bf16.msra.mxu0 %v1602
    %1626 = vmatprep.subr.bf16.mxu0 %v1601
    %1627 = vmatpush1.bf16.msra.mxu0 %v1600
    %1628 = vmatprep.subr.bf16.mxu0 %v1599
    %1629 = vmatpush1.bf16.msra.mxu0 %v1598
    %1630 = vmatprep.subr.bf16.mxu0 %v1597
    %1631 = vmatpush1.bf16.msra.mxu0 %v1596
    %1632 = vmatprep.subr.bf16.mxu0 %v1595
    %1633 = vmatpush1.bf16.msra.mxu0 %v1594
    %1634 = vmatprep.subr.bf16.mxu0 %v1593
    %1635 = vmatpush1.bf16.msra.mxu0 %v1592
    %1636 = vmatprep.subr.bf16.mxu0 %v1591
    %1637 = vmatpush1.bf16.msra.mxu0 %v1590
    %1638 = vmatprep.subr.bf16.mxu0 0
    %1639 = vmatpush2.bf16.msra.mxu0 0
    %1640 = vmatprep.subr.bf16.mxu0 0
    %1641 = vmatpush2.bf16.msra.mxu0 0
    %1642 = vmatprep.subr.bf16.mxu0 0
    %1643 = vmatpush2.bf16.msra.mxu0 0
    %1644 = vmatprep.subr.bf16.mxu0 0
    %1645 = vmatpush2.bf16.msra.mxu0 0
    %1646 = vmatprep.subr.bf16.mxu0 0
    %1647 = vmatpush2.bf16.msra.mxu0 0
    %1648 = vmatprep.subr.bf16.mxu0 0
    %1649 = vmatpush2.bf16.msra.mxu0 0
    %1650 = vmatprep.subr.bf16.mxu0 0
    %1651 = vmatpush2.bf16.msra.mxu0 0
    %1652 = vmatprep.subr.bf16.mxu0 0
    %1653 = vmatpush2.bf16.msra.mxu0 0
    %1654 = vmatprep.mubr.bf16.mxu0 0
    %1655 = vmatmul.mubr.bf16.gmra.mxu0 %v1525
    %v1656 = vpop.f32.mrf.mxu0
    %v1657 = vadd.f32 0.0, %v1656
    %v1658 = vpop.f32.mrf.mxu0
    %v1659 = vadd.f32 0.0, %v1658
    %v1660 = vpop.f32.mrf.mxu0
    %v1661 = vpop.f32.mrf.mxu0
    %1662 = vdwg.mxu0
    %v1665 = vcombine.low %v1657, %v1659
    %v1667 = vunpack.c.l.s4 1983009808
    %v1668 = vunpack.c.0.s8 %v1667
    %v1669 = vlaneseq
    %v1670 = vshrl.u32 %v1669, 7
    %v1671 = vsub.s32 %v1668, %v1670
    %v1672 = vrot.slane %v1665, %v1671
    %1674 = vst [vmem:[#allocation8] sm:$0xf] %v1672
    // Predicated region
    $region30: #{tpu_custom_call.1} parent=1 // pred_check
      _
    $region31: #{tpu_custom_call.1} parent=1 // pred_check_branch
      %1676 = sbr.rel (0) target = $region33
    $region32: #{tpu_custom_call.1} parent=1 // pred_region
      %s1678 = ssub.s32 64, 64
      %1679 = vsyncadd [#allocation4], %s1678
      %s1681 = sshll.u32 [#allocation8], 4
      %s1682 = int_to_ptr.vmem [resolvable:$true] %s1681
      %1684 = dma.vmem_to_hbm [thread:$0]  %s1682, 64, %s4, [#allocation4]
    $region33: #{tpu_custom_call.1} parent=1 // pred_fallthru
      _
    // Predicated region
    $region34: #{tpu_custom_call.1} parent=1 // pred_check
      _
    $region35: #{tpu_custom_call.1} parent=1 // pred_check_branch
      %1686 = sbr.rel (0) target = $region37
    $region36: #{tpu_custom_call.1} parent=1 // pred_region
      %1687 = dma.done [#allocation4], 64
    $region37: #{tpu_custom_call.1} parent=1 // pred_fallthru
      _
    %1688 = vsyncpa [#allocation3], 1
    %1689 = vsyncpa [#allocation6], 1
    %1690 = vsyncpa [#allocation4], 1

</llo_original>
